<compile_context>
chip_gen: v6e
topology: v6e:2x2x1
jax: 0.10.0
libtpu: 0.0.40
codegen_flags: <defaults>
</compile_context>

<pallas_src>
import jax
import jax.numpy as jnp
from jax.experimental import pallas as pl
from jax.experimental.pallas import tpu as pltpu


# ----------------------------------------------------------------------------
# pe buffer (matches the PyTorch double loop exactly, vectorized)
# ----------------------------------------------------------------------------
def make_positional_encoding(d_model, max_len):
    assert d_model % 2 == 0, "d_model must be even (PyTorch loop writes i and i+1)"
    pos = jnp.arange(max_len, dtype=jnp.float32)[:, None]            # (max_len, 1)
    i = jnp.arange(0, d_model, 2, dtype=jnp.float32)[None, :]        # (1, d_model//2)
    angle = pos / jnp.power(10000.0, i / float(d_model))             # (max_len, d_model//2)
    pe = jnp.zeros((max_len, d_model), jnp.float32)
    pe = pe.at[:, 0::2].set(jnp.sin(angle))                          # pe[pos, i]   = sin(...)
    pe = pe.at[:, 1::2].set(jnp.cos(angle))                          # pe[pos, i+1] = cos(...)
    return pe                                                        # (max_len, d_model)


# ----------------------------------------------------------------------------
# Pallas kernel: one (full-batch, lane-tile) block per grid step
# ----------------------------------------------------------------------------
def _pos_add_kernel(x_ref, pe_ref, o_ref):
    # x_ref / o_ref : (B, tile), pe_ref : (1, tile)  -> broadcast over batch in-VMEM
    o_ref[...] = x_ref[...] + pe_ref[...]


def _largest_tile(N, cap):
    """Largest legal lane tile for a length-N flattened axis.

    Prefers a multiple-of-128 divisor of N <= cap; else the full axis if it fits;
    else the largest multiple of 128 <= cap (non-dividing: Pallas pads the ragged
    last block on reads and drops out-of-bounds writes, which is safe for a pure
    elementwise add). Returns (tile, divides_evenly)."""
    cap = int(cap)
    if N <= cap:
        return N, True
    best = 0
    t = 128
    while t <= cap:
        if N % t == 0:
            best = t
        t += 128
    if best:
        return best, True
    t = (cap // 128) * 128
    if t >= 128:
        return t, False
    return N, True  # unreachable: caller guarantees cap >= 128 or N <= cap


def pos_encoder_forward(x, pe, force_pallas=False):
    """x: (B, S, d_model), pe: (max_len, d_model). Returns x + pe[:S] (broadcast over B)."""
    B, S, D = x.shape
    pe_s = pe[:S].astype(x.dtype)                  # static slice, dtype-matched to x
    N = S * D
    itemsize = jnp.dtype(x.dtype).itemsize
    total_bytes = B * N * itemsize

    # Tiny-shape fast path: a 1-2 step grid of ~KiB blocks is pure fixed overhead.
    if not force_pallas and total_bytes < 256 * 1024:
        return x + pe_s[None]

    # Lane-dense views: last dim S*D is large (>=128-multiple tiles usable even for D<128).
    x2 = x.reshape(B, N)
    pe2 = pe_s.reshape(1, N)

    # Byte-budgeted tiling. Double-buffered working set = 2 * (x + out + pe) blocks.
    vmem_limit = 32 * 1024 * 1024          # safe on v5e/v6e/v7x
    budget = 24 * 1024 * 1024              # working-set budget (headroom under limit)
    max_x_block = 2 * 1024 * 1024          # per x/out block target (~85%+ HBM BW regime)

    hard_cap = budget // (2 * (2 * B + 1) * itemsize)
    soft_cap = max(max_x_block // (B * itemsize), 128)
    tile_cap = min(hard_cap, soft_cap)

    if tile_cap < 128 and N > tile_cap:
        # Batch so large that even a 128-lane tile with the full batch blows VMEM.
        # TODO(synk): add a batch-tiled grid path for B > ~12k; plain XLA add is correct.
        return (x2 + pe2).reshape(B, S, D)

    tile, divides = _largest_tile(N, tile_cap)
    num_tiles = (N // tile) if divides else pl.cdiv(N, tile)

    x_spec = pl.BlockSpec((B, tile), lambda s: (0, s))     # full batch per block
    pe_spec = pl.BlockSpec((1, tile), lambda s: (0, s))    # DMA'd once per tile

    out = pl.pallas_call(
        _pos_add_kernel,
        out_shape=jax.ShapeDtypeStruct((B, N), x.dtype),
        grid=(num_tiles,),
        in_specs=[x_spec, pe_spec],
        out_specs=x_spec,
        compiler_params=pltpu.CompilerParams(
            dimension_semantics=("parallel",),   # v7x: shard tiles across the 2 TCs
            vmem_limit_bytes=vmem_limit),
    )(x2, pe2)
    return out.reshape(B, S, D)


# ----------------------------------------------------------------------------
# main
# ----------------------------------------------------------------------------
if __name__ == "__main__":
    key0, key1 = jax.random.split(jax.random.PRNGKey(0))

    # Config 1: small shapes matching the module demo; force the Pallas path.
    B, S, d_model, max_len = 2, 8, 32, 16
    pe = make_positional_encoding(d_model, max_len)
    x = jax.random.normal(key0, (B, S, d_model), jnp.float32)
    out = jax.block_until_ready(pos_encoder_forward(x, pe, force_pallas=True))
    ref = x + pe[None, :S, :]
    assert out.shape == (B, S, d_model)
    assert jnp.allclose(out, ref, atol=1e-6, rtol=1e-6), "mismatch vs reference (small)"

    # Config 2: larger shape that exercises the byte-budgeted multi-tile grid.
    B2, S2, D2, ML2 = 2, 512, 1024, 512
    pe_big = make_positional_encoding(D2, ML2)
    x_big = jax.random.normal(key1, (B2, S2, D2), jnp.float32)
    out_big = jax.block_until_ready(pos_encoder_forward(x_big, pe_big))
    ref_big = x_big + pe_big[None, :S2, :]
    assert out_big.shape == (B2, S2, D2)
    assert jnp.allclose(out_big, ref_big, atol=1e-6, rtol=1e-6), "mismatch vs reference (big)"

    print("KERNEL_OK")
</pallas_src>

<mosaic_0001>
module attributes {stable_mosaic.version = 11 : i64} {
  func.func @_pos_add_kernel(%arg0: i32, %arg1: memref<2x256xf32, #tpu.memory_space<vmem>>, %arg2: memref<1x256xf32, #tpu.memory_space<vmem>>, %arg3: memref<2x256xf32, #tpu.memory_space<vmem>>) attributes {dimension_semantics = [#tpu.dimension_semantics<parallel>], iteration_bounds = array<i64: 1>, scalar_prefetch = 0 : i64, scratch_operands = 0 : i64, tpu.core_type = #tpu.core_type<tc>, window_params = [{transform_indices = @transform_0, window_bounds = array<i64: 2, 256>}, {transform_indices = @transform_1, window_bounds = array<i64: 1, 256>}, {transform_indices = @transform_2, window_bounds = array<i64: 2, 256>}]} {
    %c0 = arith.constant 0 : index
    %c0_0 = arith.constant 0 : index
    %0 = vector.load %arg1[%c0, %c0_0] : memref<2x256xf32, #tpu.memory_space<vmem>>, vector<2x256xf32>
    %c0_1 = arith.constant 0 : index
    %c0_2 = arith.constant 0 : index
    %1 = vector.load %arg2[%c0_1, %c0_2] : memref<1x256xf32, #tpu.memory_space<vmem>>, vector<1x256xf32>
    %2 = vector.broadcast %1 : vector<1x256xf32> to vector<2x256xf32>
    %3 = arith.addf %0, %2 : vector<2x256xf32>
    %c0_3 = arith.constant 0 : index
    %c0_4 = arith.constant 0 : index
    %4 = vector.load %arg3[%c0_3, %c0_4] : memref<2x256xf32, #tpu.memory_space<vmem>>, vector<2x256xf32>
    tpu.vector_store %arg3[%c0_3, %c0_4], %3 {strides = array<i32>} : memref<2x256xf32, #tpu.memory_space<vmem>>, vector<2x256xf32>,
    return
  }
  func.func @transform_0(%arg0: i32) -> (i32, i32) {
    %c0_i32 = arith.constant 0 : i32
    %c0_i32_0 = arith.constant 0 : i32
    return %c0_i32, %arg0 : i32, i32
  }
  func.func @transform_1(%arg0: i32) -> (i32, i32) {
    %c0_i32 = arith.constant 0 : i32
    %c0_i32_0 = arith.constant 0 : i32
    return %c0_i32, %arg0 : i32, i32
  }
  func.func @transform_2(%arg0: i32) -> (i32, i32) {
    %c0_i32 = arith.constant 0 : i32
    %c0_i32_0 = arith.constant 0 : i32
    return %c0_i32, %arg0 : i32, i32
  }
}

</mosaic_0001>

<llo_original>
// kernel: tpu_custom_call.1
$region0: #{tpu_custom_call.1}
  #allocation0 [shape = 'u32[]', space=smem, size = 0x4, offset = 0x4, fixed_abs, tag = 'smem constant byte address 0x4 - core index']
  #allocation1 [shape = 'u32[144,128]{1,0:T(1,128)}', space=vmem, size = 0x12000, scoped, tag = 'internal scratch']
  %s0 = inlined_call_operand.hbm [shape: f32[2,256], index: 0, kind: input, shape index: {}]
  %s1 = inlined_call_operand.hbm [shape: f32[1,256], index: 1, kind: input, shape index: {}]
  %s2 = inlined_call_operand.hbm [shape: f32[2,256], index: 2, kind: output, shape index: {}]
  %s3 = sld [smem:[#allocation0]]
  $region26: #{tpu_custom_call.1} parent=0
    _
  %s5 = ssub.s32 1, %s3
  %s6 = scalar_select 0, %s5, %s3
  $region1: #{tpu_custom_call.1} parent=0
    #allocation2 [shape = 'u8[2048]{0}', space=vmem, size = 0x800, scoped, tag = 'input window, operand 0, single buffered']
    #allocation3 [shape = 's32[1]{0}', space=sflag, size = 0x4, scoped, tag = 'scoped memory for tpu_custom_call.1']
    #allocation4 [shape = 's32[1]{0}', space=sflag, size = 0x4, scoped, tag = 'scoped memory for tpu_custom_call.1']
    #allocation5 [shape = 'u8[1024]{0}', space=vmem, size = 0x400, scoped, tag = 'input window, operand 1, single buffered']
    #allocation6 [shape = 's32[1]{0}', space=sflag, size = 0x4, scoped, tag = 'scoped memory for tpu_custom_call.1']
    #allocation7 [shape = 'u8[2048]{0}', space=vmem, size = 0x800, scoped, tag = 'output window, operand 0, single buffered']
    %7 = vsyncpa [#allocation3], 0
    %8 = vsyncpa [#allocation6], 0
    %9 = vsyncpa [#allocation4], 0
    // Predicated region
    $region2: #{tpu_custom_call.1} parent=1 // pred_check
      _
    $region3: #{tpu_custom_call.1} parent=1 // pred_check_branch
      %11 = sbr.rel (0) target = $region5
    $region4: #{tpu_custom_call.1} parent=1 // pred_region
      %s13 = ssub.s32 64, 64
      %14 = vsyncadd [#allocation3], %s13
      %s16 = sshll.u32 [#allocation2], 4
      %s17 = int_to_ptr.vmem [resolvable:$true] %s16
      %19 = dma.hbm_to_vmem [thread:$0]  %s0, 64, %s17, [#allocation3]
    $region5: #{tpu_custom_call.1} parent=1 // pred_fallthru
      _
    // Predicated region
    $region6: #{tpu_custom_call.1} parent=1 // pred_check
      _
    $region7: #{tpu_custom_call.1} parent=1 // pred_check_branch
      %21 = sbr.rel (0) target = $region9
    $region8: #{tpu_custom_call.1} parent=1 // pred_region
      %s23 = ssub.s32 32, 32
      %24 = vsyncadd [#allocation6], %s23
      %s26 = sshll.u32 [#allocation5], 4
      %s27 = int_to_ptr.vmem [resolvable:$true] %s26
      %29 = dma.hbm_to_vmem [thread:$0]  %s1, 32, %s27, [#allocation6]
    $region9: #{tpu_custom_call.1} parent=1 // pred_fallthru
      _
    // Predicated region
    $region10: #{tpu_custom_call.1} parent=1 // pred_check
      _
    $region11: #{tpu_custom_call.1} parent=1 // pred_check_branch
      %31 = sbr.rel (0) target = $region13
    $region12: #{tpu_custom_call.1} parent=1 // pred_region
      %32 = dma.done [#allocation3], 64
    $region13: #{tpu_custom_call.1} parent=1 // pred_fallthru
      _
    // Predicated region
    $region14: #{tpu_custom_call.1} parent=1 // pred_check
      _
    $region15: #{tpu_custom_call.1} parent=1 // pred_check_branch
      %34 = sbr.rel (0) target = $region17
    $region16: #{tpu_custom_call.1} parent=1 // pred_region
      %35 = dma.done [#allocation6], 32
    $region17: #{tpu_custom_call.1} parent=1 // pred_fallthru
      _
    %v36 = vld [vmem:[#allocation2] sm:$0xf]
    %v37 = vld [vmem:[#allocation5] sm:$0x3]
    %v39 = vlaneseq
    %v40 = vshrl.u32 %v39, 7
    %v41 = vsub.s32 0, %v40
    %v42 = vrot.slane %v37, %v41
    %v43 = vlaneseq
    %v44 = vshrl.u32 %v43, 7
    %v45 = vsub.s32 1, %v44
    %v46 = vrot.slane %v37, %v45
    %v47 = vcombine.low %v42, %v46
    %v49 = vunpack.c.l.s4 1983009808
    %v50 = vunpack.c.0.s8 %v49
    %v51 = vlaneseq
    %v52 = vshrl.u32 %v51, 7
    %v53 = vsub.s32 %v50, %v52
    %v54 = vrot.slane %v47, %v53
    %v56 = vadd.f32 %v36, %v54
    %57 = vst [vmem:[#allocation7] sm:$0xf] %v56
    // Predicated region
    $region18: #{tpu_custom_call.1} parent=1 // pred_check
      _
    $region19: #{tpu_custom_call.1} parent=1 // pred_check_branch
      %59 = sbr.rel (0) target = $region21
    $region20: #{tpu_custom_call.1} parent=1 // pred_region
      %s61 = ssub.s32 64, 64
      %62 = vsyncadd [#allocation4], %s61
      %s64 = sshll.u32 [#allocation7], 4
      %s65 = int_to_ptr.vmem [resolvable:$true] %s64
      %67 = dma.vmem_to_hbm [thread:$0]  %s65, 64, %s2, [#allocation4]
    $region21: #{tpu_custom_call.1} parent=1 // pred_fallthru
      _
    // Predicated region
    $region22: #{tpu_custom_call.1} parent=1 // pred_check
      _
    $region23: #{tpu_custom_call.1} parent=1 // pred_check_branch
      %69 = sbr.rel (0) target = $region25
    $region24: #{tpu_custom_call.1} parent=1 // pred_region
      %70 = dma.done [#allocation4], 64
    $region25: #{tpu_custom_call.1} parent=1 // pred_fallthru
      _
    %71 = vsyncpa [#allocation3], 1
    %72 = vsyncpa [#allocation6], 1
    %73 = vsyncpa [#allocation4], 1

</llo_original>
